<compile_context>
chip_gen: v6e
topology: v6e:2x2x1
jax: 0.10.0
libtpu: 0.0.40
codegen_flags: <defaults>
</compile_context>

<pallas_src>
import functools

import jax
import jax.numpy as jnp
from jax.experimental import pallas as pl
from jax.experimental.pallas import tpu as pltpu

LANE = 128      # last block dim must be a multiple of this (or full extent)
SUBLANE = 8     # second-to-last block dim multiple (f32)


def _round_up(x, m):
    return ((x + m - 1) // m) * m


def _pad2d(x, rows, cols):
    r, c = x.shape
    return jnp.pad(x, ((0, rows - r), (0, cols - c)))


@functools.lru_cache(maxsize=None)
def _vmem_limit_bytes():
    """Scoped-VMEM limit: ~3/4 of physical VMEM, capped at 100 MiB.

    128 MiB parts (v5e/v6e) -> 96 MiB; 64 MiB parts (v7x) -> 48 MiB.
    """
    try:
        cap = int(pltpu.get_tpu_info().vmem_capacity_bytes)
    except Exception:
        cap = 64 * 1024 * 1024   # conservative (v7x-sized) fallback
    return int(min(cap * 3 // 4, 100 * 1024 * 1024))


def _pick_tile_s(tile_s):
    """Reduction (src) tile: 2048 on 128 MiB-VMEM parts, 1024 on v7x."""
    if tile_s is not None:
        return tile_s
    return 2048 if _vmem_limit_bytes() >= 64 * 1024 * 1024 else 1024


def _pick_tile_d(d_target, tile_d):
    """Dst tile: multiple of 8; split into >=2 tiles when the problem allows so
    the 'parallel' dst axis shards across v7x's two TensorCores."""
    d8 = _round_up(max(d_target, 1), SUBLANE)
    t_d = _round_up(min(tile_d, d8), SUBLANE)
    if d8 > SUBLANE and _round_up(d8, t_d) // t_d < 2:
        t_d = _round_up((d8 + 1) // 2, SUBLANE)
    return t_d


# ----------------------------------------------------------------------------
# Kernels: grid = (dst tiles, src tiles); src (axis 1) is the reduction axis.
# ----------------------------------------------------------------------------

def sage_kernel_agg_first(a_ref, xsrc_ref, xdst_ref, wself_ref, wneigh_ref,
                          b_ref, o_ref, acc_ref, *, apply_relu):
    """out = x_dst @ W_self + (A @ X_src) @ W_neigh + b ; acc = (t_d, F_in_p) f32."""
    s = pl.program_id(1)

    @pl.when(s == 0)
    def _():
        acc_ref[...] = jnp.zeros_like(acc_ref)

    acc_ref[...] += jnp.dot(a_ref[...], xsrc_ref[...],
                            preferred_element_type=jnp.float32)

    @pl.when(s == pl.num_programs(1) - 1)
    def _():
        out = (jnp.dot(acc_ref[...].astype(wneigh_ref.dtype), wneigh_ref[...],
                       preferred_element_type=jnp.float32)
               + jnp.dot(xdst_ref[...], wself_ref[...],
                         preferred_element_type=jnp.float32)
               + b_ref[...])
        if apply_relu:
            out = jnp.maximum(out, 0.0)
        o_ref[...] = out.astype(o_ref.dtype)


def sage_kernel_proj_first(a_ref, xsrcp_ref, xdst_ref, wself_ref, b_ref,
                           o_ref, acc_ref, *, apply_relu):
    """out = x_dst @ W_self + A @ (X_src @ W_neigh) + b.

    X_src @ W_neigh is hoisted out of the kernel (computed once, not per dst
    tile); xsrcp_ref streams the projected (t_s, F_out_p) features. The self
    term + bias seed the accumulator on the first src step so nothing but the
    ReLU/cast remains on the finalize path. acc = (t_d, F_out_p) f32.
    """
    s = pl.program_id(1)

    @pl.when(s == 0)
    def _():
        acc_ref[...] = (jnp.dot(xdst_ref[...], wself_ref[...],
                                preferred_element_type=jnp.float32)
                        + b_ref[...])

    acc_ref[...] += jnp.dot(a_ref[...], xsrcp_ref[...],
                            preferred_element_type=jnp.float32)

    @pl.when(s == pl.num_programs(1) - 1)
    def _():
        out = acc_ref[...]
        if apply_relu:
            out = jnp.maximum(out, 0.0)
        o_ref[...] = out.astype(o_ref.dtype)


# ----------------------------------------------------------------------------
# Layer wrapper
# ----------------------------------------------------------------------------

def sage_layer(a, x_src, x_dst, w_self, w_neigh, bias, *, apply_relu,
               out_dtype=jnp.float32, min_out_rows=0,
               tile_d=512, tile_s=None, compute_dtype=jnp.bfloat16):
    """One SAGEConv(mean) layer:  x_dst @ W_self + (A @ X_src) @ W_neigh + b.

    `a`, `x_src`, `x_dst` may arrive pre-padded with zero rows/cols and already
    in `compute_dtype` (zero padding is neutral everywhere); then the in-layer
    pad/cast are no-ops. Returns the PADDED (d_p, F_out_p) output in
    `out_dtype`; the caller slices the true rows/cols (this lets the next layer
    consume it directly without an HBM re-pad/re-cast pass).
    """
    f_in, f_out = w_self.shape
    f_in_p = _round_up(f_in, LANE)
    f_out_p = _round_up(f_out, LANE)

    vmem_limit = _vmem_limit_bytes()
    tile_s = _pick_tile_s(tile_s)

    s_pre = max(a.shape[1], x_src.shape[0])
    t_s = _round_up(min(tile_s, _round_up(s_pre, LANE)), LANE)
    s_p = _round_up(s_pre, t_s)

    d_pre = max(a.shape[0], x_dst.shape[0], min_out_rows)
    t_d = _pick_tile_d(d_pre, tile_d)
    d_p = _round_up(d_pre, t_d)

    # Project-first when it shrinks the streamed feature width.
    project_first = f_out_p < f_in_p
    acc_cols = f_out_p if project_first else f_in_p

    a_pad = _pad2d(a, d_p, s_p).astype(compute_dtype)
    xdst_pad = _pad2d(x_dst, d_p, f_in_p).astype(compute_dtype)
    wself_pad = _pad2d(w_self, f_in_p, f_out_p).astype(compute_dtype)
    wneigh_pad = _pad2d(w_neigh, f_in_p, f_out_p).astype(compute_dtype)
    b_pad = _pad2d(bias.reshape(1, -1), 1, f_out_p).astype(jnp.float32)

    if project_first:
        # Hoisted projection: one XLA matmul, reused by every dst tile.
        xsrc_c = _pad2d(x_src, x_src.shape[0], f_in_p).astype(compute_dtype)
        xsrc_feat = jnp.dot(xsrc_c, wneigh_pad,
                            preferred_element_type=jnp.float32).astype(compute_dtype)
        xsrc_feat = _pad2d(xsrc_feat, s_p, f_out_p)
        kernel = functools.partial(sage_kernel_proj_first, apply_relu=apply_relu)
        in_specs = [
            pl.BlockSpec((t_d, t_s), lambda i, k: (i, k)),           # A
            pl.BlockSpec((t_s, f_out_p), lambda i, k: (k, 0)),       # X_src @ W_neigh
            pl.BlockSpec((t_d, f_in_p), lambda i, k: (i, 0)),        # x_dst
            pl.BlockSpec((f_in_p, f_out_p), lambda i, k: (0, 0)),    # W_self  (resident)
            pl.BlockSpec((1, f_out_p), lambda i, k: (0, 0)),         # bias    (resident)
        ]
        operands = (a_pad, xsrc_feat, xdst_pad, wself_pad, b_pad)
    else:
        xsrc_feat = _pad2d(x_src, s_p, f_in_p).astype(compute_dtype)
        kernel = functools.partial(sage_kernel_agg_first, apply_relu=apply_relu)
        in_specs = [
            pl.BlockSpec((t_d, t_s), lambda i, k: (i, k)),           # A
            pl.BlockSpec((t_s, f_in_p), lambda i, k: (k, 0)),        # x_src
            pl.BlockSpec((t_d, f_in_p), lambda i, k: (i, 0)),        # x_dst
            pl.BlockSpec((f_in_p, f_out_p), lambda i, k: (0, 0)),    # W_self  (resident)
            pl.BlockSpec((f_in_p, f_out_p), lambda i, k: (0, 0)),    # W_neigh (resident)
            pl.BlockSpec((1, f_out_p), lambda i, k: (0, 0)),         # bias    (resident)
        ]
        operands = (a_pad, xsrc_feat, xdst_pad, wself_pad, wneigh_pad, b_pad)

    grid = (d_p // t_d, s_p // t_s)
    out_pad = pl.pallas_call(
        kernel,
        out_shape=jax.ShapeDtypeStruct((d_p, f_out_p), out_dtype),
        grid_spec=pltpu.PrefetchScalarGridSpec(
            num_scalar_prefetch=0,
            grid=grid,
            in_specs=in_specs,
            out_specs=pl.BlockSpec((t_d, f_out_p), lambda i, k: (i, 0)),
            scratch_shapes=[pltpu.VMEM((t_d, acc_cols), jnp.float32)],
        ),
        compiler_params=pltpu.CompilerParams(
            dimension_semantics=("parallel", "arbitrary"),
            vmem_limit_bytes=vmem_limit,
        ),
    )(*operands)
    return out_pad


# ----------------------------------------------------------------------------
# Model forward (== Model.forward(mfgs, x))
# ----------------------------------------------------------------------------

def model_forward(params, adjs, x, num_dst, *, tile_d=512, tile_s=None):
    """adjs = (A1 [>=D1 x >=S1], A2 [>=D2 x >=D1]) row-normalized (possibly
    pre-padded / bf16); x : [>=S1, in_feats(+pad)]; num_dst = (D1, D2)."""
    a1, a2 = adjs
    d1, d2 = num_dst
    num_classes = params["w_self2"].shape[1]

    # Row padding layer 2 wants for its source features, so layer 1 emits h
    # already bf16 + padded (no HBM slice/pad/cast pass between the layers).
    ts = _pick_tile_s(tile_s)
    s2_pre = max(a2.shape[1], d1)
    t_s2 = _round_up(min(ts, _round_up(s2_pre, LANE)), LANE)
    s2_p = _round_up(s2_pre, t_s2)

    # conv1 + ReLU (fused);  h_dst = x[:num_dst_nodes(mfg0)]
    h = sage_layer(a1, x, x[:d1],
                   params["w_self1"], params["w_neigh1"], params["b1"],
                   apply_relu=True, out_dtype=jnp.bfloat16,
                   min_out_rows=s2_p, tile_d=tile_d, tile_s=tile_s)

    # conv2 (no activation);  h_dst = h[:num_dst_nodes(mfg1)]
    out = sage_layer(a2, h, h[:d2],
                     params["w_self2"], params["w_neigh2"], params["b2"],
                     apply_relu=False, out_dtype=jnp.float32,
                     tile_d=tile_d, tile_s=tile_s)
    return out[:d2, :num_classes]


def make_row_normalized_adj(key, num_dst, num_src, p=0.5):
    """Random bipartite adjacency, row-normalized for mean aggregation."""
    adj = (jax.random.uniform(key, (num_dst, num_src)) < p).astype(jnp.float32)
    deg = jnp.sum(adj, axis=1, keepdims=True)
    return adj / jnp.maximum(deg, 1.0)       # DGL mean: 0 for zero-in-degree dst


if __name__ == "__main__":
    in_feats, h_feats, num_classes = 8, 32, 4
    num_src1, num_dst1, num_dst2 = 16, 8, 4   # |src(mfg0)|, |dst(mfg0)|=|src(mfg1)|, |dst(mfg1)|

    key = jax.random.PRNGKey(0)
    keys = jax.random.split(key, 12)

    x = jax.random.normal(keys[0], (num_src1, in_feats), dtype=jnp.float32)
    a1 = make_row_normalized_adj(keys[1], num_dst1, num_src1)
    a2 = make_row_normalized_adj(keys[2], num_dst2, num_dst1)

    def init_linear(k, fin, fout):
        scale = 1.0 / jnp.sqrt(jnp.float32(fin))
        return jax.random.uniform(k, (fin, fout), minval=-scale, maxval=scale,
                                  dtype=jnp.float32)

    params = {
        "w_self1":  init_linear(keys[3], in_feats, h_feats),
        "w_neigh1": init_linear(keys[4], in_feats, h_feats),
        "b1":       jnp.zeros((1, h_feats), dtype=jnp.float32),
        "w_self2":  init_linear(keys[5], h_feats, num_classes),
        "w_neigh2": init_linear(keys[6], h_feats, num_classes),
        "b2":       jnp.zeros((1, num_classes), dtype=jnp.float32),
    }

    # Pre-materialize the big streamed operands zero-padded & in the compute
    # dtype ONCE, so the in-layer pad/cast are no-ops (no extra HBM passes).
    s1_p = _round_up(num_src1, LANE)
    d1_p = _round_up(num_dst1, LANE)          # also layer-2's padded src count
    d2_p = _round_up(num_dst2, SUBLANE)
    f_in_p = _round_up(in_feats, LANE)
    x_p = _pad2d(x, s1_p, f_in_p).astype(jnp.bfloat16)
    a1_p = _pad2d(a1, d1_p, s1_p).astype(jnp.bfloat16)
    a2_p = _pad2d(a2, d2_p, d1_p).astype(jnp.bfloat16)

    out = model_forward(params, (a1_p, a2_p), x_p, num_dst=(num_dst1, num_dst2))
    out = jax.block_until_ready(out)

    # Pure-f32 reference of the same math (tolerance covers the bf16 casts).
    def ref_layer(a, xs, xd, ws, wn, b, relu):
        r = xd @ ws + (a @ xs) @ wn + b
        return jnp.maximum(r, 0.0) if relu else r

    h_ref = ref_layer(a1, x, x[:num_dst1],
                      params["w_self1"], params["w_neigh1"], params["b1"], True)
    ref = ref_layer(a2, h_ref, h_ref[:num_dst2],
                    params["w_self2"], params["w_neigh2"], params["b2"], False)
    assert out.shape == (num_dst2, num_classes)
    assert jnp.allclose(out, ref, atol=5e-2, rtol=5e-2), (
        f"max abs diff {jnp.max(jnp.abs(out - ref))}")

    # Also exercise the project-first path (padded F_out < padded F_in).
    nd_b, ns_b, fin_b, fout_b = 24, 48, 256, 64
    xb = jax.random.normal(keys[7], (ns_b, fin_b), dtype=jnp.float32)
    ab = make_row_normalized_adj(keys[8], nd_b, ns_b)
    wsb = init_linear(keys[9], fin_b, fout_b)
    wnb = init_linear(keys[10], fin_b, fout_b)
    bb = 0.1 * jax.random.normal(keys[11], (1, fout_b), dtype=jnp.float32)
    yb = sage_layer(ab, xb, xb[:nd_b], wsb, wnb, bb,
                    apply_relu=True)[:nd_b, :fout_b]
    yb = jax.block_until_ready(yb)
    ref_b = ref_layer(ab, xb, xb[:nd_b], wsb, wnb, bb, True)
    assert jnp.allclose(yb, ref_b, atol=5e-2, rtol=5e-2), (
        f"project-first max abs diff {jnp.max(jnp.abs(yb - ref_b))}")

    print("KERNEL_OK")
</pallas_src>

<mosaic_0001>
module attributes {stable_mosaic.version = 11 : i64} {
  func.func @sage_kernel_agg_first(%arg0: i32, %arg1: i32, %arg2: memref<64x128xbf16, #tpu.memory_space<vmem>>, %arg3: memref<128x128xbf16, #tpu.memory_space<vmem>>, %arg4: memref<64x128xbf16, #tpu.memory_space<vmem>>, %arg5: memref<128x128xbf16, #tpu.memory_space<vmem>>, %arg6: memref<128x128xbf16, #tpu.memory_space<vmem>>, %arg7: memref<1x128xf32, #tpu.memory_space<vmem>>, %arg8: memref<64x128xbf16, #tpu.memory_space<vmem>>, %arg9: memref<64x128xf32, #tpu.memory_space<vmem>>) attributes {dimension_semantics = [#tpu.dimension_semantics<parallel>, #tpu.dimension_semantics<arbitrary>], iteration_bounds = array<i64: 2, 1>, scalar_prefetch = 0 : i64, scratch_operands = 1 : i64, tpu.core_type = #tpu.core_type<tc>, window_params = [{transform_indices = @transform_0, window_bounds = array<i64: 64, 128>}, {transform_indices = @transform_1, window_bounds = array<i64: 128, 128>}, {transform_indices = @transform_2, window_bounds = array<i64: 64, 128>}, {pipeline_mode = #tpu.pipeline_mode<synchronous>, transform_indices = @transform_3, window_bounds = array<i64: 128, 128>}, {pipeline_mode = #tpu.pipeline_mode<synchronous>, transform_indices = @transform_4, window_bounds = array<i64: 128, 128>}, {pipeline_mode = #tpu.pipeline_mode<synchronous>, transform_indices = @transform_5, window_bounds = array<i64: 1, 128>}, {transform_indices = @transform_6, window_bounds = array<i64: 64, 128>}]} {
    %c0_i32 = arith.constant 0 : i32
    %0 = arith.cmpi eq, %arg1, %c0_i32 : i32
    %1 = arith.extui %0 : i1 to i32
    %c0_i32_0 = arith.constant 0 : i32
    %2 = arith.cmpi ne, %1, %c0_i32_0 : i32
    scf.if %2 {
      %cst_10 = arith.constant 0.000000e+00 : f32
      %12 = vector.broadcast %cst_10 : f32 to vector<64x128xf32>
      %c0_11 = arith.constant 0 : index
      %c0_12 = arith.constant 0 : index
      %13 = vector.load %arg9[%c0_11, %c0_12] : memref<64x128xf32, #tpu.memory_space<vmem>>, vector<64x128xf32>
      tpu.vector_store %arg9[%c0_11, %c0_12], %12 {strides = array<i32>} : memref<64x128xf32, #tpu.memory_space<vmem>>, vector<64x128xf32>,
    } else {
    }
    %c0 = arith.constant 0 : index
    %c0_1 = arith.constant 0 : index
    %3 = vector.load %arg9[%c0, %c0_1] : memref<64x128xf32, #tpu.memory_space<vmem>>, vector<64x128xf32>
    %c0_2 = arith.constant 0 : index
    %c0_3 = arith.constant 0 : index
    %4 = vector.load %arg2[%c0_2, %c0_3] : memref<64x128xbf16, #tpu.memory_space<vmem>>, vector<64x128xbf16>
    %c0_4 = arith.constant 0 : index
    %c0_5 = arith.constant 0 : index
    %5 = vector.load %arg3[%c0_4, %c0_5] : memref<128x128xbf16, #tpu.memory_space<vmem>>, vector<128x128xbf16>
    %cst = arith.constant dense<0.000000e+00> : vector<64x128xf32>
    %6 = tpu.matmul %4, %5, %cst {dimension_numbers = #tpu.dot_dimension_numbers<[1], [0], [0], [1], [0, 0, 1, 1], [], []>} : vector<64x128xbf16>, vector<128x128xbf16>, vector<64x128xf32> -> vector<64x128xf32>
    %7 = arith.addf %3, %6 : vector<64x128xf32>
    %c0_6 = arith.constant 0 : index
    %c0_7 = arith.constant 0 : index
    %8 = vector.load %arg9[%c0_6, %c0_7] : memref<64x128xf32, #tpu.memory_space<vmem>>, vector<64x128xf32>
    tpu.vector_store %arg9[%c0_6, %c0_7], %7 {strides = array<i32>} : memref<64x128xf32, #tpu.memory_space<vmem>>, vector<64x128xf32>,
    %c0_i32_8 = arith.constant 0 : i32
    %9 = arith.cmpi eq, %arg1, %c0_i32_8 : i32
    %10 = arith.extui %9 : i1 to i32
    %c0_i32_9 = arith.constant 0 : i32
    %11 = arith.cmpi ne, %10, %c0_i32_9 : i32
    scf.if %11 {
      %c0_10 = arith.constant 0 : index
      %c0_11 = arith.constant 0 : index
      %12 = vector.load %arg9[%c0_10, %c0_11] : memref<64x128xf32, #tpu.memory_space<vmem>>, vector<64x128xf32>
      %13 = arith.truncf %12 : vector<64x128xf32> to vector<64x128xbf16>
      %c0_12 = arith.constant 0 : index
      %c0_13 = arith.constant 0 : index
      %14 = vector.load %arg6[%c0_12, %c0_13] : memref<128x128xbf16, #tpu.memory_space<vmem>>, vector<128x128xbf16>
      %cst_14 = arith.constant dense<0.000000e+00> : vector<64x128xf32>
      %15 = tpu.matmul %13, %14, %cst_14 {dimension_numbers = #tpu.dot_dimension_numbers<[1], [0], [0], [1], [0, 0, 1, 1], [], []>} : vector<64x128xbf16>, vector<128x128xbf16>, vector<64x128xf32> -> vector<64x128xf32>
      %c0_15 = arith.constant 0 : index
      %c0_16 = arith.constant 0 : index
      %16 = vector.load %arg4[%c0_15, %c0_16] : memref<64x128xbf16, #tpu.memory_space<vmem>>, vector<64x128xbf16>
      %c0_17 = arith.constant 0 : index
      %c0_18 = arith.constant 0 : index
      %17 = vector.load %arg5[%c0_17, %c0_18] : memref<128x128xbf16, #tpu.memory_space<vmem>>, vector<128x128xbf16>
      %cst_19 = arith.constant dense<0.000000e+00> : vector<64x128xf32>
      %18 = tpu.matmul %16, %17, %cst_19 {dimension_numbers = #tpu.dot_dimension_numbers<[1], [0], [0], [1], [0, 0, 1, 1], [], []>} : vector<64x128xbf16>, vector<128x128xbf16>, vector<64x128xf32> -> vector<64x128xf32>
      %19 = arith.addf %15, %18 : vector<64x128xf32>
      %c0_20 = arith.constant 0 : index
      %c0_21 = arith.constant 0 : index
      %20 = vector.load %arg7[%c0_20, %c0_21] : memref<1x128xf32, #tpu.memory_space<vmem>>, vector<1x128xf32>
      %21 = vector.broadcast %20 : vector<1x128xf32> to vector<64x128xf32>
      %22 = arith.addf %19, %21 : vector<64x128xf32>
      %cst_22 = arith.constant 0.000000e+00 : f32
      %23 = vector.broadcast %cst_22 : f32 to vector<64x128xf32>
      %24 = arith.maximumf %22, %23 : vector<64x128xf32>
      %25 = arith.truncf %24 : vector<64x128xf32> to vector<64x128xbf16>
      %c0_23 = arith.constant 0 : index
      %c0_24 = arith.constant 0 : index
      %26 = vector.load %arg8[%c0_23, %c0_24] : memref<64x128xbf16, #tpu.memory_space<vmem>>, vector<64x128xbf16>
      tpu.vector_store %arg8[%c0_23, %c0_24], %25 {strides = array<i32>} : memref<64x128xbf16, #tpu.memory_space<vmem>>, vector<64x128xbf16>,
    } else {
    }
    return
  }
  func.func @transform_0(%arg0: i32, %arg1: i32) -> (i32, i32) {
    %c0_i32 = arith.constant 0 : i32
    return %arg0, %arg1 : i32, i32
  }
  func.func @transform_1(%arg0: i32, %arg1: i32) -> (i32, i32) {
    %c0_i32 = arith.constant 0 : i32
    %c0_i32_0 = arith.constant 0 : i32
    return %arg1, %c0_i32 : i32, i32
  }
  func.func @transform_2(%arg0: i32, %arg1: i32) -> (i32, i32) {
    %c0_i32 = arith.constant 0 : i32
    %c0_i32_0 = arith.constant 0 : i32
    return %arg0, %c0_i32 : i32, i32
  }
  func.func @transform_3(%arg0: i32, %arg1: i32) -> (i32, i32) {
    %c0_i32 = arith.constant 0 : i32
    %c0_i32_0 = arith.constant 0 : i32
    %c0_i32_1 = arith.constant 0 : i32
    return %c0_i32, %c0_i32_0 : i32, i32
  }
  func.func @transform_4(%arg0: i32, %arg1: i32) -> (i32, i32) {
    %c0_i32 = arith.constant 0 : i32
    %c0_i32_0 = arith.constant 0 : i32
    %c0_i32_1 = arith.constant 0 : i32
    return %c0_i32, %c0_i32_0 : i32, i32
  }
  func.func @transform_5(%arg0: i32, %arg1: i32) -> (i32, i32) {
    %c0_i32 = arith.constant 0 : i32
    %c0_i32_0 = arith.constant 0 : i32
    %c0_i32_1 = arith.constant 0 : i32
    return %c0_i32, %c0_i32_0 : i32, i32
  }
  func.func @transform_6(%arg0: i32, %arg1: i32) -> (i32, i32) {
    %c0_i32 = arith.constant 0 : i32
    %c0_i32_0 = arith.constant 0 : i32
    return %arg0, %c0_i32 : i32, i32
  }
}

</mosaic_0001>

<llo_original>
// kernel: tpu_custom_call.1
$region0: #{tpu_custom_call.1}
  #allocation0 [shape = 'u32[]', space=smem, size = 0x4, offset = 0x4, fixed_abs, tag = 'smem constant byte address 0x4 - core index']
  #allocation1 [shape = 'u32[144,128]{1,0:T(1,128)}', space=vmem, size = 0x12000, scoped, tag = 'internal scratch']
  #allocation2 [shape = 'f32[64,128]{1,0:T(8,128)}', space=vmem, size = 0x8000, scoped, tag = 'scratch operand']
  %s0 = inlined_call_operand.hbm [shape: bf16[128,128], index: 0, kind: input, shape index: {}]
  %s1 = inlined_call_operand.hbm [shape: bf16[128,128], index: 1, kind: input, shape index: {}]
  %s2 = inlined_call_operand.hbm [shape: bf16[128,128], index: 2, kind: input, shape index: {}]
  %s3 = inlined_call_operand.hbm [shape: bf16[128,128], index: 3, kind: input, shape index: {}]
  %s4 = inlined_call_operand.hbm [shape: bf16[128,128], index: 4, kind: input, shape index: {}]
  %s5 = inlined_call_operand.vmem [shape: f32[1,128], index: 5, kind: input, shape index: {}]
  %s6 = inlined_call_operand.hbm [shape: bf16[128,128], index: 6, kind: output, shape index: {}]
  %s7 = sld [smem:[#allocation0]]
  $region85: #{tpu_custom_call.1} parent=0
    _
  %s9 = ssub.s32 1, %s7
  %s10 = scalar_select 0, %s9, %s7
  $region1: #{tpu_custom_call.1} parent=0
    #allocation3 [shape = 'u8[32768]{0}', space=vmem, size = 0x8000, scoped, tag = 'input window, operand 0']
    #allocation4 [shape = 's32[2]{0}', space=sflag, size = 0x8, scoped, tag = 'scoped memory for tpu_custom_call.1']
    #allocation5 [shape = 's32[2]{0}', space=sflag, size = 0x8, scoped, tag = 'scoped memory for tpu_custom_call.1']
    #allocation6 [shape = 'u8[32768]{0}', space=vmem, size = 0x8000, scoped, tag = 'input window, operand 1, single buffered']
    #allocation7 [shape = 's32[1]{0}', space=sflag, size = 0x4, scoped, tag = 'scoped memory for tpu_custom_call.1']
    #allocation8 [shape = 'u8[32768]{0}', space=vmem, size = 0x8000, scoped, tag = 'input window, operand 2']
    #allocation9 [shape = 'u8[32768]{0}', space=vmem, size = 0x8000, scoped, tag = 'input window, operand 3, single buffered']
    #allocation10 [shape = 'u8[32768]{0}', space=vmem, size = 0x8000, scoped, tag = 'input window, operand 4, single buffered']
    #allocation11 [shape = 's32[1]{0}', space=sflag, size = 0x4, scoped, tag = 'scoped memory for tpu_custom_call.1']
    #allocation12 [shape = 'u8[32768]{0}', space=vmem, size = 0x8000, scoped, tag = 'output window, operand 0']
    %11 = vsyncpa [#allocation4], 0
    %s12 = scalar_lea.sflag [#allocation4], 1
    %13 = vsyncpa %s12, 0
    %14 = vsyncpa [#allocation7], 0
    %15 = vsyncpa [#allocation11], 0
    %16 = vsyncpa [#allocation5], 0
    %s17 = scalar_lea.sflag [#allocation5], 1
    %18 = vsyncpa %s17, 0
    loop: start=0, step=1, limit=4
    $region2: #{tpu_custom_call.1} parent=1 // loop_pre_header
      _
    $region3: #{tpu_custom_call.1} parent=1 // loop_header
      %s20 = sphi 0, %s24
      %p21 = scmp.ge.s32.totalorder %s20, 4
      %s27 = sphi 0, %s39
      %s28 = sphi 0, %s35
      %s29 = sphi 0, %s27
      %s30 = sphi 0, %s28
      %s31 = sphi 0, %s29
      %s32 = sphi 0, %s30
      %s44 = sphi 0, %s46
      %s47 = sphi 0, %s44
      %s48 = sphi 0, %s47
      %s64 = sphi 0, %s48
      %s70 = sphi 0, %s72
      %s73 = sphi 0, %s70
      %s74 = sphi 0, %s73
      %s90 = sphi 0, %s74
      %s96 = sphi 0, %s98
      %s99 = sphi 0, %s96
      %s100 = sphi 0, %s99
      %s116 = sphi 0, %s100
      %s120 = sphi 0, %s120
      %s122 = sphi 0, %s120
      %s123 = sphi 0, %s122
      %s137 = sphi 0, %s123
      %s141 = sphi 0, %s141
      %s143 = sphi 0, %s141
      %s144 = sphi 0, %s143
      %s158 = sphi 0, %s144
      %s162 = sphi 0, %s162
      %s164 = sphi 0, %s162
      %s165 = sphi 0, %s164
      %s179 = sphi 0, %s165
      %s185 = sphi 0, %s187
      %s188 = sphi 0, %s185
      %s189 = sphi 0, %s188
      %s205 = sphi 0, %s189
    $region4: #{tpu_custom_call.1} parent=1 // loop_header_branch
      %23 = sbr.rel (%p21) target = $region8
    $region5: #{tpu_custom_call.1} parent=1 // loop_body
      %s25 = ssub.s32 %s20, 1
      %s26 = ssub.s32 %s20, 2
      %s33 = sadd.s32 1, %s28
      %p34 = scmp.ge.s32.totalorder %s33, 1
      %s35 = scalar_select %p34, 0, %s33
      %s36 = sadd.s32 1, %s27
      %s37 = scalar_select %p34, %s36, %s27
      %p38 = scmp.ge.s32.totalorder %s37, 2
      %s39 = scalar_select %p38, 0, %s37
      %s40 = ssub.s32 %s27, %s39
      %s41 = ssub.s32 %s28, %s35
      %s42 = sor.u32 %s40, %s41
      %p43 = scmp.eq.s32.totalorder %s42, 0
      %s45 = sadd.s32 %s44, 1
      %s46 = scalar_select %p43, %s44, %s45
      %p49 = pneg %p43
      %p50 = scmp.eq.s32.totalorder %s20, 1
      %p51 = por %p49, %p50
      %p52 = scmp.ne.s32.totalorder %s44, %s47
      %p53 = scmp.eq.s32.totalorder %s20, 0
      %p54 = por %p52, %p53
      %p55 = scmp.ne.s32.totalorder %s44, %s47
      %p56 = scmp.eq.s32.totalorder %s25, 1
      %p57 = por %p55, %p56
      %p58 = scmp.ne.s32.totalorder %s47, %s48
      %p59 = scmp.eq.s32.totalorder %s25, 0
      %p60 = por %p58, %p59
      %p61 = scmp.ne.s32.totalorder %s47, %s48
      %p62 = scmp.eq.s32.totalorder %s26, 1
      %p63 = por %p61, %p62
      %p65 = scmp.ne.s32.totalorder %s48, %s64
      %p66 = scmp.eq.s32.totalorder %s26, 0
      %p67 = por %p65, %p66
      %s68 = ssub.s32 %s28, %s35
      %p69 = scmp.eq.s32.totalorder %s68, 0
      %s71 = sadd.s32 %s70, 1
      %s72 = scalar_select %p69, %s70, %s71
      %p75 = pneg %p69
      %p76 = scmp.eq.s32.totalorder %s20, 1
      %p77 = por %p75, %p76
      %p78 = scmp.ne.s32.totalorder %s70, %s73
      %p79 = scmp.eq.s32.totalorder %s20, 0
      %p80 = por %p78, %p79
      %p81 = scmp.ne.s32.totalorder %s70, %s73
      %p82 = scmp.eq.s32.totalorder %s25, 1
      %p83 = por %p81, %p82
      %p84 = scmp.ne.s32.totalorder %s73, %s74
      %p85 = scmp.eq.s32.totalorder %s25, 0
      %p86 = por %p84, %p85
      %p87 = scmp.ne.s32.totalorder %s73, %s74
      %p88 = scmp.eq.s32.totalorder %s26, 1
      %p89 = por %p87, %p88
      %p91 = scmp.ne.s32.totalorder %s74, %s90
      %p92 = scmp.eq.s32.totalorder %s26, 0
      %p93 = por %p91, %p92
      %s94 = ssub.s32 %s27, %s39
      %p95 = scmp.eq.s32.totalorder %s94, 0
      %s97 = sadd.s32 %s96, 1
      %s98 = scalar_select %p95, %s96, %s97
      %p101 = pneg %p95
      %p102 = scmp.eq.s32.totalorder %s20, 1
      %p103 = por %p101, %p102
      %p104 = scmp.ne.s32.totalorder %s96, %s99
      %p105 = scmp.eq.s32.totalorder %s20, 0
      %p106 = por %p104, %p105
      %p107 = scmp.ne.s32.totalorder %s96, %s99
      %p108 = scmp.eq.s32.totalorder %s25, 1
      %p109 = por %p107, %p108
      %p110 = scmp.ne.s32.totalorder %s99, %s100
      %p111 = scmp.eq.s32.totalorder %s25, 0
      %p112 = por %p110, %p111
      %p113 = scmp.ne.s32.totalorder %s99, %s100
      %p114 = scmp.eq.s32.totalorder %s26, 1
      %p115 = por %p113, %p114
      %p117 = scmp.ne.s32.totalorder %s100, %s116
      %p118 = scmp.eq.s32.totalorder %s26, 0
      %p119 = por %p117, %p118
      %s121 = sadd.s32 %s120, 1
      %p124 = scmp.eq.s32.totalorder %s20, 1
      %p125 = scmp.ne.s32.totalorder %s120, %s122
      %p126 = scmp.eq.s32.totalorder %s20, 0
      %p127 = por %p125, %p126
      %p128 = scmp.ne.s32.totalorder %s120, %s122
      %p129 = scmp.eq.s32.totalorder %s25, 1
      %p130 = por %p128, %p129
      %p131 = scmp.ne.s32.totalorder %s122, %s123
      %p132 = scmp.eq.s32.totalorder %s25, 0
      %p133 = por %p131, %p132
      %p134 = scmp.ne.s32.totalorder %s122, %s123
      %p135 = scmp.eq.s32.totalorder %s26, 1
      %p136 = por %p134, %p135
      %p138 = scmp.ne.s32.totalorder %s123, %s137
      %p139 = scmp.eq.s32.totalorder %s26, 0
      %p140 = por %p138, %p139
      %s142 = sadd.s32 %s141, 1
      %p145 = scmp.eq.s32.totalorder %s20, 1
      %p146 = scmp.ne.s32.totalorder %s141, %s143
      %p147 = scmp.eq.s32.totalorder %s20, 0
      %p148 = por %p146, %p147
      %p149 = scmp.ne.s32.totalorder %s141, %s143
      %p150 = scmp.eq.s32.totalorder %s25, 1
      %p151 = por %p149, %p150
      %p152 = scmp.ne.s32.totalorder %s143, %s144
      %p153 = scmp.eq.s32.totalorder %s25, 0
      %p154 = por %p152, %p153
      %p155 = scmp.ne.s32.totalorder %s143, %s144
      %p156 = scmp.eq.s32.totalorder %s26, 1
      %p157 = por %p155, %p156
      %p159 = scmp.ne.s32.totalorder %s144, %s158
      %p160 = scmp.eq.s32.totalorder %s26, 0
      %p161 = por %p159, %p160
      %s163 = sadd.s32 %s162, 1
      %p166 = scmp.eq.s32.totalorder %s20, 1
      %p167 = scmp.ne.s32.totalorder %s162, %s164
      %p168 = scmp.eq.s32.totalorder %s20, 0
      %p169 = por %p167, %p168
      %p170 = scmp.ne.s32.totalorder %s162, %s164
      %p171 = scmp.eq.s32.totalorder %s25, 1
      %p172 = por %p170, %p171
      %p173 = scmp.ne.s32.totalorder %s164, %s165
      %p174 = scmp.eq.s32.totalorder %s25, 0
      %p175 = por %p173, %p174
      %p176 = scmp.ne.s32.totalorder %s164, %s165
      %p177 = scmp.eq.s32.totalorder %s26, 1
      %p178 = por %p176, %p177
      %p180 = scmp.ne.s32.totalorder %s165, %s179
      %p181 = scmp.eq.s32.totalorder %s26, 0
      %p182 = por %p180, %p181
      %s183 = ssub.s32 %s27, %s39
      %p184 = scmp.eq.s32.totalorder %s183, 0
      %s186 = sadd.s32 %s185, 1
      %s187 = scalar_select %p184, %s185, %s186
      %p190 = pneg %p184
      %p191 = scmp.eq.s32.totalorder %s20, 1
      %p192 = por %p190, %p191
      %p193 = scmp.ne.s32.totalorder %s185, %s188
      %p194 = scmp.eq.s32.totalorder %s20, 0
      %p195 = por %p193, %p194
      %p196 = scmp.ne.s32.totalorder %s185, %s188
      %p197 = scmp.eq.s32.totalorder %s25, 1
      %p198 = por %p196, %p197
      %p199 = scmp.ne.s32.totalorder %s188, %s189
      %p200 = scmp.eq.s32.totalorder %s25, 0
      %p201 = por %p199, %p200
      %p202 = scmp.ne.s32.totalorder %s188, %s189
      %p203 = scmp.eq.s32.totalorder %s26, 1
      %p204 = por %p202, %p203
      %p206 = scmp.ne.s32.totalorder %s189, %s205
      %p207 = scmp.eq.s32.totalorder %s26, 0
      %p208 = por %p206, %p207
      %p209 = scmp.le.s32.totalorder 1, %s20
      %p210 = scmp.lt.s32.totalorder %s20, 3
      %p211 = pnand %p209, %p210
      %p212 = pneg %p211
      // Predicated region
      $region9: #{tpu_custom_call.1} parent=5 // pred_check
        _
      $region10: #{tpu_custom_call.1} parent=5 // pred_check_branch
        %214 = sbr.rel (%p211) target = $region12
      $region11: #{tpu_custom_call.1} parent=5 // pred_region
        %s215 = ssub.s32 %s20, 1
        // Predicated region
        $region13: #{tpu_custom_call.1} parent=11 // pred_check
          %p216 = pneg %p86
        $region14: #{tpu_custom_call.1} parent=11 // pred_check_branch
          %218 = sbr.rel (%p216) target = $region16
        $region15: #{tpu_custom_call.1} parent=11 // pred_region
          %s219 = smul.u32 16, %s30
          %s221 = ssub.s32 1024, 1024
          %222 = vsyncadd [#allocation7], %s221
          %s223 = smul.addr %s219, 64
          %s224 = scalar_lea.hbm %s1, %s223
          %s225 = sshll.u32 [#allocation6], 4
          %s226 = int_to_ptr.vmem [resolvable:$true] %s225
          %231 = dma.hbm_to_vmem [thread:$0]  %s224, 1024, %s226, [#allocation7], 64, 64, 4
        $region16: #{tpu_custom_call.1} parent=11 // pred_fallthru
          _
        // Predicated region
        $region17: #{tpu_custom_call.1} parent=11 // pred_check
          %p232 = pneg %p133
        $region18: #{tpu_custom_call.1} parent=11 // pred_check_branch
          %234 = sbr.rel (%p232) target = $region20
        $region19: #{tpu_custom_call.1} parent=11 // pred_region
          %s236 = ssub.s32 1024, 1024
          %237 = vsyncadd [#allocation7], %s236
          %s238 = sshll.u32 [#allocation9], 4
          %s239 = int_to_ptr.vmem [resolvable:$true] %s238
          %244 = dma.hbm_to_vmem [thread:$0]  %s3, 1024, %s239, [#allocation7], 64, 64, 4
        $region20: #{tpu_custom_call.1} parent=11 // pred_fallthru
          _
        // Predicated region
        $region21: #{tpu_custom_call.1} parent=11 // pred_check
          %p245 = pneg %p154
        $region22: #{tpu_custom_call.1} parent=11 // pred_check_branch
          %247 = sbr.rel (%p245) target = $region24
        $region23: #{tpu_custom_call.1} parent=11 // pred_region
          %s249 = ssub.s32 1024, 1024
          %250 = vsyncadd [#allocation11], %s249
          %s251 = sshll.u32 [#allocation10], 4
          %s252 = int_to_ptr.vmem [resolvable:$true] %s251
          %257 = dma.hbm_to_vmem [thread:$0]  %s4, 1024, %s252, [#allocation11], 64, 64, 4
        $region24: #{tpu_custom_call.1} parent=11 // pred_fallthru
          _
        // Predicated region
        $region25: #{tpu_custom_call.1} parent=11 // pred_check
          %p258 = pneg %p175
        $region26: #{tpu_custom_call.1} parent=11 // pred_check_branch
          %260 = sbr.rel (%p258) target = $region28
        $region27: #{tpu_custom_call.1} parent=11 // pred_region
          _
        $region28: #{tpu_custom_call.1} parent=11 // pred_fallthru
          _
      $region12: #{tpu_custom_call.1} parent=5 // pred_fallthru
        _
      %p261 = scmp.lt.s32.totalorder %s20, 2
      // Predicated region
      $region29: #{tpu_custom_call.1} parent=5 // pred_check
        %p262 = pneg %p261
      $region30: #{tpu_custom_call.1} parent=5 // pred_check_branch
        %264 = sbr.rel (%p262) target = $region32
      $region31: #{tpu_custom_call.1} parent=5 // pred_region
        // Predicated region
        $region33: #{tpu_custom_call.1} parent=31 // pred_check
          %p265 = pneg %p54
        $region34: #{tpu_custom_call.1} parent=31 // pred_check_branch
          %267 = sbr.rel (%p265) target = $region36
        $region35: #{tpu_custom_call.1} parent=31 // pred_region
          %s268 = sand.u32 %s20, 1
          %s269 = scalar_lea.sflag [#allocation4], %s268
          %s270 = sand.u32 %s44, 1
          %s271 = smul.addr %s270, 32
          %s272 = scalar_lea.vmem [#allocation3], %s271
          %s273 = smul.u32 8, %s27
          %s275 = ssub.s32 512, 512
          %276 = vsyncadd %s269, %s275
          %s277 = sadd.s32 %s28, %s273
          %s278 = smul.addr %s277, 64
          %s279 = scalar_lea.hbm %s0, %s278
          %s280 = sshll.u32 %s272, 4
          %s281 = int_to_ptr.vmem [resolvable:$true] %s280
          %286 = dma.hbm_to_vmem [thread:$0]  %s279, 512, %s281, %s269, 64, 64, 4
        $region36: #{tpu_custom_call.1} parent=31 // pred_fallthru
          _
        // Predicated region
        $region37: #{tpu_custom_call.1} parent=31 // pred_check
          %p287 = pneg %p106
        $region38: #{tpu_custom_call.1} parent=31 // pred_check_branch
          %289 = sbr.rel (%p287) target = $region40
        $region39: #{tpu_custom_call.1} parent=31 // pred_region
          %s290 = sand.u32 %s20, 1
          %s291 = scalar_lea.sflag [#allocation4], %s290
          %s292 = sand.u32 %s96, 1
          %s293 = smul.addr %s292, 32
          %s294 = scalar_lea.vmem [#allocation8], %s293
          %s295 = smul.u32 8, %s27
          %s297 = ssub.s32 512, 512
          %298 = vsyncadd %s291, %s297
          %s299 = smul.addr %s295, 64
          %s300 = scalar_lea.hbm %s2, %s299
          %s301 = sshll.u32 %s294, 4
          %s302 = int_to_ptr.vmem [resolvable:$true] %s301
          %307 = dma.hbm_to_vmem [thread:$0]  %s300, 512, %s302, %s291, 64, 64, 4
        $region40: #{tpu_custom_call.1} parent=31 // pred_fallthru
          _
      $region32: #{tpu_custom_call.1} parent=5 // pred_fallthru
        _
      %p308 = scmp.le.s32.totalorder 1, %s20
      %p309 = scmp.lt.s32.totalorder %s20, 3
      %p310 = pnand %p308, %p309
      %p311 = pneg %p310
      // Predicated region
      $region41: #{tpu_custom_call.1} parent=5 // pred_check
        _
      $region42: #{tpu_custom_call.1} parent=5 // pred_check_branch
        %313 = sbr.rel (%p310) target = $region44
      $region43: #{tpu_custom_call.1} parent=5 // pred_region
        %s314 = ssub.s32 %s20, 1
        %s315 = sand.u32 %s25, 1
        %s316 = scalar_lea.sflag [#allocation4], %s315
        %s317 = sand.u32 %s47, 1
        %s318 = smul.addr %s317, 32
        %s319 = scalar_lea.vmem [#allocation3], %s318
        // Predicated region
        $region45: #{tpu_custom_call.1} parent=43 // pred_check
          %p320 = pneg %p60
        $region46: #{tpu_custom_call.1} parent=43 // pred_check_branch
          %322 = sbr.rel (%p320) target = $region48
        $region47: #{tpu_custom_call.1} parent=43 // pred_region
          %323 = dma.done %s316, 512
        $region48: #{tpu_custom_call.1} parent=43 // pred_fallthru
          _
        // Predicated region
        $region49: #{tpu_custom_call.1} parent=43 // pred_check
          %p324 = pneg %p86
        $region50: #{tpu_custom_call.1} parent=43 // pred_check_branch
          %326 = sbr.rel (%p324) target = $region52
        $region51: #{tpu_custom_call.1} parent=43 // pred_region
          %327 = dma.done [#allocation7], 1024
        $region52: #{tpu_custom_call.1} parent=43 // pred_fallthru
          _
        %s328 = sand.u32 %s25, 1
        %s329 = scalar_lea.sflag [#allocation4], %s328
        %s330 = sand.u32 %s99, 1
        %s331 = smul.addr %s330, 32
        %s332 = scalar_lea.vmem [#allocation8], %s331
        // Predicated region
        $region53: #{tpu_custom_call.1} parent=43 // pred_check
          %p333 = pneg %p112
        $region54: #{tpu_custom_call.1} parent=43 // pred_check_branch
          %335 = sbr.rel (%p333) target = $region56
        $region55: #{tpu_custom_call.1} parent=43 // pred_region
          %336 = dma.done %s329, 512
        $region56: #{tpu_custom_call.1} parent=43 // pred_fallthru
          _
        // Predicated region
        $region57: #{tpu_custom_call.1} parent=43 // pred_check
          %p337 = pneg %p133
        $region58: #{tpu_custom_call.1} parent=43 // pred_check_branch
          %339 = sbr.rel (%p337) target = $region60
        $region59: #{tpu_custom_call.1} parent=43 // pred_region
          %340 = dma.done [#allocation7], 1024
        $region60: #{tpu_custom_call.1} parent=43 // pred_fallthru
          _
        // Predicated region
        $region61: #{tpu_custom_call.1} parent=43 // pred_check
          %p341 = pneg %p154
        $region62: #{tpu_custom_call.1} parent=43 // pred_check_branch
          %343 = sbr.rel (%p341) target = $region64
        $region63: #{tpu_custom_call.1} parent=43 // pred_region
          %344 = dma.done [#allocation11], 1024
        $region64: #{tpu_custom_call.1} parent=43 // pred_fallthru
          _
        %s345 = sand.u32 %s25, 1
        %s346 = scalar_lea.sflag [#allocation4], %s345
        %s347 = sand.u32 %s47, 1
        %s348 = smul.addr %s347, 32
        %s349 = scalar_lea.vmem [#allocation3], %s348
        %p350 = pneg %p60
        %p351 = pneg %p57
        %p352 = pneg %p86
        %p353 = pneg %p83
        %s354 = sand.u32 %s25, 1
        %s355 = scalar_lea.sflag [#allocation4], %s354
        %s356 = sand.u32 %s99, 1
        %s357 = smul.addr %s356, 32
        %s358 = scalar_lea.vmem [#allocation8], %s357
        %p359 = pneg %p112
        %p360 = pneg %p109
        %p361 = pneg %p133
        %p362 = pneg %p130
        %p363 = pneg %p154
        %p364 = pneg %p151
        %p365 = pneg %p175
        %p366 = pneg %p172
        %p367 = pneg %p201
        %p368 = pneg %p198
        %s369 = sand.u32 %s188, 1
        %s370 = scalar_lea.sflag [#allocation5], %s369
        %s371 = sand.u32 %s188, 1
        %s372 = smul.addr %s371, 32
        %s373 = scalar_lea.vmem [#allocation12], %s372
        %s374 = smul.u32 8, %s29
        %s375 = smul.u32 16, %s30
        %s376 = smul.u32 8, %s29
        %s377 = smul.u32 8, %s29
        %p379 = scmp.eq.s32.totalorder %s30, 0
        // Predicated region
        $region65: #{tpu_custom_call.1} parent=43 // pred_check
          %p380 = pneg %p379
        $region66: #{tpu_custom_call.1} parent=43 // pred_check_branch
          %382 = sbr.rel (%p380) target = $region68
        $region67: #{tpu_custom_call.1} parent=43 // pred_region
          %383 = vst [vmem:[#allocation2] sm:$0xff] 0.0
          %384 = vst [vmem:[#allocation2 + $0x8] sm:$0xff] 0.0
          %385 = vst [vmem:[#allocation2 + $0x10] sm:$0xff] 0.0
          %386 = vst [vmem:[#allocation2 + $0x18] sm:$0xff] 0.0
          %387 = vst [vmem:[#allocation2 + $0x20] sm:$0xff] 0.0
          %388 = vst [vmem:[#allocation2 + $0x28] sm:$0xff] 0.0
          %389 = vst [vmem:[#allocation2 + $0x30] sm:$0xff] 0.0
          %390 = vst [vmem:[#allocation2 + $0x38] sm:$0xff] 0.0
        $region68: #{tpu_custom_call.1} parent=43 // pred_fallthru
          _
        %v391 = vld [vmem:[#allocation2] sm:$0xff]
        %v392 = vld [vmem:[#allocation2 + $0x8] sm:$0xff]
        %v393 = vld [vmem:[#allocation2 + $0x10] sm:$0xff]
        %v394 = vld [vmem:[#allocation2 + $0x18] sm:$0xff]
        %v395 = vld [vmem:[#allocation2 + $0x20] sm:$0xff]
        %v396 = vld [vmem:[#allocation2 + $0x28] sm:$0xff]
        %v397 = vld [vmem:[#allocation2 + $0x30] sm:$0xff]
        %v398 = vld [vmem:[#allocation2 + $0x38] sm:$0xff]
        %v399 = vld [vmem:[%s319] sm:$0xf]
        %v400 = vld [vmem:[%s319 + $0x4] sm:$0xf]
        %v401 = vld [vmem:[%s319 + $0x8] sm:$0xf]
        %v402 = vld [vmem:[%s319 + $0xc] sm:$0xf]
        %v403 = vld [vmem:[%s319 + $0x10] sm:$0xf]
        %v404 = vld [vmem:[%s319 + $0x14] sm:$0xf]
        %v405 = vld [vmem:[%s319 + $0x18] sm:$0xf]
        %v406 = vld [vmem:[%s319 + $0x1c] sm:$0xf]
        %v407 = vld [vmem:[#allocation6] sm:$0xf]
        %v408 = vld [vmem:[#allocation6 + $0x4] sm:$0xf]
        %v409 = vld [vmem:[#allocation6 + $0x8] sm:$0xf]
        %v410 = vld [vmem:[#allocation6 + $0xc] sm:$0xf]
        %v411 = vld [vmem:[#allocation6 + $0x10] sm:$0xf]
        %v412 = vld [vmem:[#allocation6 + $0x14] sm:$0xf]
        %v413 = vld [vmem:[#allocation6 + $0x18] sm:$0xf]
        %v414 = vld [vmem:[#allocation6 + $0x1c] sm:$0xf]
        %v415 = vld [vmem:[#allocation6 + $0x20] sm:$0xf]
        %v416 = vld [vmem:[#allocation6 + $0x24] sm:$0xf]
        %v417 = vld [vmem:[#allocation6 + $0x28] sm:$0xf]
        %v418 = vld [vmem:[#allocation6 + $0x2c] sm:$0xf]
        %v419 = vld [vmem:[#allocation6 + $0x30] sm:$0xf]
        %v420 = vld [vmem:[#allocation6 + $0x34] sm:$0xf]
        %v421 = vld [vmem:[#allocation6 + $0x38] sm:$0xf]
        %v422 = vld [vmem:[#allocation6 + $0x3c] sm:$0xf]
        %v431 = vunpack.c.l.b16 %v399
        %v432 = vunpack.c.l.b16 %v400
        %v433 = vunpack.c.l.b16 %v401
        %v434 = vunpack.c.l.b16 %v402
        %v435 = vunpack.c.l.b16 %v403
        %v436 = vunpack.c.l.b16 %v404
        %v437 = vunpack.c.l.b16 %v405
        %v438 = vunpack.c.l.b16 %v406
        %v439 = vpack.c.b16 %v432, %v431
        %v440 = vpack.c.b16 %v434, %v433
        %v441 = vpack.c.b16 %v436, %v435
        %v442 = vpack.c.b16 %v438, %v437
        %v463 = vunpack.c.l.b16 %v407
        %v464 = vunpack.c.l.b16 %v408
        %v465 = vunpack.c.l.b16 %v409
        %v466 = vunpack.c.l.b16 %v410
        %v467 = vunpack.c.l.b16 %v411
        %v468 = vunpack.c.l.b16 %v412
        %v469 = vunpack.c.l.b16 %v413
        %v470 = vunpack.c.l.b16 %v414
        %v471 = vunpack.c.l.b16 %v415
        %v472 = vunpack.c.l.b16 %v416
        %v473 = vunpack.c.l.b16 %v417
        %v474 = vunpack.c.l.b16 %v418
        %v475 = vunpack.c.l.b16 %v419
        %v476 = vunpack.c.l.b16 %v420
        %v477 = vunpack.c.l.b16 %v421
        %v478 = vunpack.c.l.b16 %v422
        %v479 = vpack.c.b16 %v464, %v463
        %v480 = vpack.c.b16 %v466, %v465
        %v481 = vpack.c.b16 %v468, %v467
        %v482 = vpack.c.b16 %v470, %v469
        %v483 = vpack.c.b16 %v472, %v471
        %v484 = vpack.c.b16 %v474, %v473
        %v485 = vpack.c.b16 %v476, %v475
        %v486 = vpack.c.b16 %v478, %v477
        %495 = vmatprep.subr.bf16.mxu0 0
        %496 = vmatpush1.bf16.msra.mxu0 %v486
        %497 = vmatprep.subr.bf16.mxu0 0
        %498 = vmatpush1.bf16.msra.mxu0 %v485
        %499 = vmatprep.subr.bf16.mxu0 0
        %500 = vmatpush1.bf16.msra.mxu0 %v484
        %501 = vmatprep.subr.bf16.mxu0 0
        %502 = vmatpush1.bf16.msra.mxu0 %v483
        %503 = vmatprep.subr.bf16.mxu0 0
        %504 = vmatpush1.bf16.msra.mxu0 %v482
        %505 = vmatprep.subr.bf16.mxu0 0
        %506 = vmatpush1.bf16.msra.mxu0 %v481
        %507 = vmatprep.subr.bf16.mxu0 0
        %508 = vmatpush1.bf16.msra.mxu0 %v480
        %509 = vmatprep.subr.bf16.mxu0 0
        %510 = vmatpush1.bf16.msra.mxu0 %v479
        %511 = vmatprep.subr.bf16.mxu0 0
        %512 = vmatpush2.bf16.msra.mxu0 0
        %513 = vmatprep.subr.bf16.mxu0 0
        %514 = vmatpush2.bf16.msra.mxu0 0
        %515 = vmatprep.subr.bf16.mxu0 0
        %516 = vmatpush2.bf16.msra.mxu0 0
        %517 = vmatprep.subr.bf16.mxu0 0
        %518 = vmatpush2.bf16.msra.mxu0 0
        %519 = vmatprep.subr.bf16.mxu0 0
        %520 = vmatpush2.bf16.msra.mxu0 0
        %521 = vmatprep.subr.bf16.mxu0 0
        %522 = vmatpush2.bf16.msra.mxu0 0
        %523 = vmatprep.subr.bf16.mxu0 0
        %524 = vmatpush2.bf16.msra.mxu0 0
        %525 = vmatprep.subr.bf16.mxu0 0
        %526 = vmatpush2.bf16.msra.mxu0 0
        %527 = vmatprep.mubr.bf16.mxu0 0
        %528 = vmatmul.mubr.bf16.gmra.mxu0 %v439
        %v529 = vpop.f32.mrf.mxu0
        %v530 = vadd.f32 0.0, %v529
        %v531 = vpop.f32.mrf.mxu0
        %v532 = vpop.f32.mrf.mxu0
        %v533 = vadd.f32 0.0, %v532
        %v534 = vpop.f32.mrf.mxu0
        %535 = vmatprep.mubr.bf16.mxu0 0
        %536 = vmatmul.mubr.bf16.gmra.mxu0 %v440
        %v537 = vpop.f32.mrf.mxu0
        %v538 = vadd.f32 0.0, %v537
        %v539 = vpop.f32.mrf.mxu0
        %v540 = vpop.f32.mrf.mxu0
        %v541 = vadd.f32 0.0, %v540
        %v542 = vpop.f32.mrf.mxu0
        %543 = vmatprep.mubr.bf16.mxu0 0
        %544 = vmatmul.mubr.bf16.gmra.mxu0 %v441
        %v545 = vpop.f32.mrf.mxu0
        %v546 = vadd.f32 0.0, %v545
        %v547 = vpop.f32.mrf.mxu0
        %v548 = vpop.f32.mrf.mxu0
        %v549 = vadd.f32 0.0, %v548
        %v550 = vpop.f32.mrf.mxu0
        %551 = vmatprep.mubr.bf16.mxu0 0
        %552 = vmatmul.mubr.bf16.gmra.mxu0 %v442
        %v553 = vpop.f32.mrf.mxu0
        %v554 = vadd.f32 0.0, %v553
        %v555 = vpop.f32.mrf.mxu0
        %v556 = vpop.f32.mrf.mxu0
        %v557 = vadd.f32 0.0, %v556
        %v558 = vpop.f32.mrf.mxu0
        %559 = vdwg.mxu0
        %v560 = vadd.f32 %v391, %v530
        %v561 = vadd.f32 %v392, %v533
        %v562 = vadd.f32 %v393, %v538
        %v563 = vadd.f32 %v394, %v541
        %v564 = vadd.f32 %v395, %v546
        %v565 = vadd.f32 %v396, %v549
        %v566 = vadd.f32 %v397, %v554
        %v567 = vadd.f32 %v398, %v557
        %568 = vst [vmem:[#allocation2] sm:$0xff] %v560
        %569 = vst [vmem:[#allocation2 + $0x8] sm:$0xff] %v561
        %570 = vst [vmem:[#allocation2 + $0x10] sm:$0xff] %v562
        %571 = vst [vmem:[#allocation2 + $0x18] sm:$0xff] %v563
        %572 = vst [vmem:[#allocation2 + $0x20] sm:$0xff] %v564
        %573 = vst [vmem:[#allocation2 + $0x28] sm:$0xff] %v565
        %574 = vst [vmem:[#allocation2 + $0x30] sm:$0xff] %v566
        %575 = vst [vmem:[#allocation2 + $0x38] sm:$0xff] %v567
        // Predicated region
        $region69: #{tpu_custom_call.1} parent=43 // pred_check
          %p576 = pneg %p379
        $region70: #{tpu_custom_call.1} parent=43 // pred_check_branch
          %578 = sbr.rel (%p576) target = $region72
        $region71: #{tpu_custom_call.1} parent=43 // pred_region
          %v579 = vld [vmem:[#allocation2] sm:$0xff]
          %v580 = vld [vmem:[#allocation2 + $0x8] sm:$0xff]
          %v581 = vld [vmem:[#allocation2 + $0x10] sm:$0xff]
          %v582 = vld [vmem:[#allocation2 + $0x18] sm:$0xff]
          %v583 = vld [vmem:[#allocation2 + $0x20] sm:$0xff]
          %v584 = vld [vmem:[#allocation2 + $0x28] sm:$0xff]
          %v585 = vld [vmem:[#allocation2 + $0x30] sm:$0xff]
          %v586 = vld [vmem:[#allocation2 + $0x38] sm:$0xff]
          %v587 = vpack.c.bf16 %v580, %v579
          %v588 = vpack.c.bf16 %v582, %v581
          %v589 = vpack.c.bf16 %v584, %v583
          %v590 = vpack.c.bf16 %v586, %v585
          %v591 = vld [vmem:[#allocation10] sm:$0xf]
          %v592 = vld [vmem:[#allocation10 + $0x4] sm:$0xf]
          %v593 = vld [vmem:[#allocation10 + $0x8] sm:$0xf]
          %v594 = vld [vmem:[#allocation10 + $0xc] sm:$0xf]
          %v595 = vld [vmem:[#allocation10 + $0x10] sm:$0xf]
          %v596 = vld [vmem:[#allocation10 + $0x14] sm:$0xf]
          %v597 = vld [vmem:[#allocation10 + $0x18] sm:$0xf]
          %v598 = vld [vmem:[#allocation10 + $0x1c] sm:$0xf]
          %v599 = vld [vmem:[#allocation10 + $0x20] sm:$0xf]
          %v600 = vld [vmem:[#allocation10 + $0x24] sm:$0xf]
          %v601 = vld [vmem:[#allocation10 + $0x28] sm:$0xf]
          %v602 = vld [vmem:[#allocation10 + $0x2c] sm:$0xf]
          %v603 = vld [vmem:[#allocation10 + $0x30] sm:$0xf]
          %v604 = vld [vmem:[#allocation10 + $0x34] sm:$0xf]
          %v605 = vld [vmem:[#allocation10 + $0x38] sm:$0xf]
          %v606 = vld [vmem:[#allocation10 + $0x3c] sm:$0xf]
          %v607 = vld [vmem:[%s332] sm:$0xf]
          %v608 = vld [vmem:[%s332 + $0x4] sm:$0xf]
          %v609 = vld [vmem:[%s332 + $0x8] sm:$0xf]
          %v610 = vld [vmem:[%s332 + $0xc] sm:$0xf]
          %v611 = vld [vmem:[%s332 + $0x10] sm:$0xf]
          %v612 = vld [vmem:[%s332 + $0x14] sm:$0xf]
          %v613 = vld [vmem:[%s332 + $0x18] sm:$0xf]
          %v614 = vld [vmem:[%s332 + $0x1c] sm:$0xf]
          %v615 = vld [vmem:[#allocation9] sm:$0xf]
          %v616 = vld [vmem:[#allocation9 + $0x4] sm:$0xf]
          %v617 = vld [vmem:[#allocation9 + $0x8] sm:$0xf]
          %v618 = vld [vmem:[#allocation9 + $0xc] sm:$0xf]
          %v619 = vld [vmem:[#allocation9 + $0x10] sm:$0xf]
          %v620 = vld [vmem:[#allocation9 + $0x14] sm:$0xf]
          %v621 = vld [vmem:[#allocation9 + $0x18] sm:$0xf]
          %v622 = vld [vmem:[#allocation9 + $0x1c] sm:$0xf]
          %v623 = vld [vmem:[#allocation9 + $0x20] sm:$0xf]
          %v624 = vld [vmem:[#allocation9 + $0x24] sm:$0xf]
          %v625 = vld [vmem:[#allocation9 + $0x28] sm:$0xf]
          %v626 = vld [vmem:[#allocation9 + $0x2c] sm:$0xf]
          %v627 = vld [vmem:[#allocation9 + $0x30] sm:$0xf]
          %v628 = vld [vmem:[#allocation9 + $0x34] sm:$0xf]
          %v629 = vld [vmem:[#allocation9 + $0x38] sm:$0xf]
          %v630 = vld [vmem:[#allocation9 + $0x3c] sm:$0xf]
          %v639 = vunpack.c.l.b16 %v607
          %v640 = vunpack.c.l.b16 %v608
          %v641 = vunpack.c.l.b16 %v609
          %v642 = vunpack.c.l.b16 %v610
          %v643 = vunpack.c.l.b16 %v611
          %v644 = vunpack.c.l.b16 %v612
          %v645 = vunpack.c.l.b16 %v613
          %v646 = vunpack.c.l.b16 %v614
          %v647 = vpack.c.b16 %v640, %v639
          %v648 = vpack.c.b16 %v642, %v641
          %v649 = vpack.c.b16 %v644, %v643
          %v650 = vpack.c.b16 %v646, %v645
          %v671 = vunpack.c.l.b16 %v615
          %v672 = vunpack.c.l.b16 %v616
          %v673 = vunpack.c.l.b16 %v617
          %v674 = vunpack.c.l.b16 %v618
          %v675 = vunpack.c.l.b16 %v619
          %v676 = vunpack.c.l.b16 %v620
          %v677 = vunpack.c.l.b16 %v621
          %v678 = vunpack.c.l.b16 %v622
          %v679 = vunpack.c.l.b16 %v623
          %v680 = vunpack.c.l.b16 %v624
          %v681 = vunpack.c.l.b16 %v625
          %v682 = vunpack.c.l.b16 %v626
          %v683 = vunpack.c.l.b16 %v627
          %v684 = vunpack.c.l.b16 %v628
          %v685 = vunpack.c.l.b16 %v629
          %v686 = vunpack.c.l.b16 %v630
          %v687 = vpack.c.b16 %v672, %v671
          %v688 = vpack.c.b16 %v674, %v673
          %v689 = vpack.c.b16 %v676, %v675
          %v690 = vpack.c.b16 %v678, %v677
          %v691 = vpack.c.b16 %v680, %v679
          %v692 = vpack.c.b16 %v682, %v681
          %v693 = vpack.c.b16 %v684, %v683
          %v694 = vpack.c.b16 %v686, %v685
          %703 = vmatprep.subr.bf16.mxu0 0
          %704 = vmatpush1.bf16.msra.mxu0 %v694
          %705 = vmatprep.subr.bf16.mxu0 0
          %706 = vmatpush1.bf16.msra.mxu0 %v693
          %707 = vmatprep.subr.bf16.mxu0 0
          %708 = vmatpush1.bf16.msra.mxu0 %v692
          %709 = vmatprep.subr.bf16.mxu0 0
          %710 = vmatpush1.bf16.msra.mxu0 %v691
          %711 = vmatprep.subr.bf16.mxu0 0
          %712 = vmatpush1.bf16.msra.mxu0 %v690
          %713 = vmatprep.subr.bf16.mxu0 0
          %714 = vmatpush1.bf16.msra.mxu0 %v689
          %715 = vmatprep.subr.bf16.mxu0 0
          %716 = vmatpush1.bf16.msra.mxu0 %v688
          %717 = vmatprep.subr.bf16.mxu0 0
          %718 = vmatpush1.bf16.msra.mxu0 %v687
          %719 = vmatprep.subr.bf16.mxu0 0
          %720 = vmatpush2.bf16.msra.mxu0 0
          %721 = vmatprep.subr.bf16.mxu0 0
          %722 = vmatpush2.bf16.msra.mxu0 0
          %723 = vmatprep.subr.bf16.mxu0 0
          %724 = vmatpush2.bf16.msra.mxu0 0
          %725 = vmatprep.subr.bf16.mxu0 0
          %726 = vmatpush2.bf16.msra.mxu0 0
          %727 = vmatprep.subr.bf16.mxu0 0
          %728 = vmatpush2.bf16.msra.mxu0 0
          %729 = vmatprep.subr.bf16.mxu0 0
          %730 = vmatpush2.bf16.msra.mxu0 0
          %731 = vmatprep.subr.bf16.mxu0 0
          %732 = vmatpush2.bf16.msra.mxu0 0
          %733 = vmatprep.subr.bf16.mxu0 0
          %734 = vmatpush2.bf16.msra.mxu0 0
          %735 = vmatprep.mubr.bf16.mxu0 0
          %736 = vmatmul.mubr.bf16.gmra.mxu0 %v647
          %v737 = vpop.f32.mrf.mxu0
          %v738 = vadd.f32 0.0, %v737
          %v739 = vpop.f32.mrf.mxu0
          %v740 = vpop.f32.mrf.mxu0
          %v741 = vadd.f32 0.0, %v740
          %v742 = vpop.f32.mrf.mxu0
          %743 = vmatprep.mubr.bf16.mxu0 0
          %744 = vmatmul.mubr.bf16.gmra.mxu0 %v648
          %v745 = vpop.f32.mrf.mxu0
          %v746 = vadd.f32 0.0, %v745
          %v747 = vpop.f32.mrf.mxu0
          %v748 = vpop.f32.mrf.mxu0
          %v749 = vadd.f32 0.0, %v748
          %v750 = vpop.f32.mrf.mxu0
          %751 = vmatprep.mubr.bf16.mxu0 0
          %752 = vmatmul.mubr.bf16.gmra.mxu0 %v649
          %v753 = vpop.f32.mrf.mxu0
          %v754 = vadd.f32 0.0, %v753
          %v755 = vpop.f32.mrf.mxu0
          %v756 = vpop.f32.mrf.mxu0
          %v757 = vadd.f32 0.0, %v756
          %v758 = vpop.f32.mrf.mxu0
          %759 = vmatprep.mubr.bf16.mxu0 0
          %760 = vmatmul.mubr.bf16.gmra.mxu0 %v650
          %v761 = vpop.f32.mrf.mxu0
          %v762 = vadd.f32 0.0, %v761
          %v763 = vpop.f32.mrf.mxu0
          %v764 = vpop.f32.mrf.mxu0
          %v765 = vadd.f32 0.0, %v764
          %v766 = vpop.f32.mrf.mxu0
          %767 = vdwg.mxu0
          %v784 = vunpack.c.l.b16 %v591
          %v785 = vunpack.c.l.b16 %v592
          %v786 = vunpack.c.l.b16 %v593
          %v787 = vunpack.c.l.b16 %v594
          %v788 = vunpack.c.l.b16 %v595
          %v789 = vunpack.c.l.b16 %v596
          %v790 = vunpack.c.l.b16 %v597
          %v791 = vunpack.c.l.b16 %v598
          %v792 = vunpack.c.l.b16 %v599
          %v793 = vunpack.c.l.b16 %v600
          %v794 = vunpack.c.l.b16 %v601
          %v795 = vunpack.c.l.b16 %v602
          %v796 = vunpack.c.l.b16 %v603
          %v797 = vunpack.c.l.b16 %v604
          %v798 = vunpack.c.l.b16 %v605
          %v799 = vunpack.c.l.b16 %v606
          %v800 = vpack.c.b16 %v785, %v784
          %v801 = vpack.c.b16 %v787, %v786
          %v802 = vpack.c.b16 %v789, %v788
          %v803 = vpack.c.b16 %v791, %v790
          %v804 = vpack.c.b16 %v793, %v792
          %v805 = vpack.c.b16 %v795, %v794
          %v806 = vpack.c.b16 %v797, %v796
          %v807 = vpack.c.b16 %v799, %v798
          %816 = vmatprep.subr.bf16.mxu0 0
          %817 = vmatpush1.bf16.msra.mxu0 %v807
          %818 = vmatprep.subr.bf16.mxu0 0
          %819 = vmatpush1.bf16.msra.mxu0 %v806
          %820 = vmatprep.subr.bf16.mxu0 0
          %821 = vmatpush1.bf16.msra.mxu0 %v805
          %822 = vmatprep.subr.bf16.mxu0 0
          %823 = vmatpush1.bf16.msra.mxu0 %v804
          %824 = vmatprep.subr.bf16.mxu0 0
          %825 = vmatpush1.bf16.msra.mxu0 %v803
          %826 = vmatprep.subr.bf16.mxu0 0
          %827 = vmatpush1.bf16.msra.mxu0 %v802
          %828 = vmatprep.subr.bf16.mxu0 0
          %829 = vmatpush1.bf16.msra.mxu0 %v801
          %830 = vmatprep.subr.bf16.mxu0 0
          %831 = vmatpush1.bf16.msra.mxu0 %v800
          %832 = vmatprep.subr.bf16.mxu0 0
          %833 = vmatpush2.bf16.msra.mxu0 0
          %834 = vmatprep.subr.bf16.mxu0 0
          %835 = vmatpush2.bf16.msra.mxu0 0
          %836 = vmatprep.subr.bf16.mxu0 0
          %837 = vmatpush2.bf16.msra.mxu0 0
          %838 = vmatprep.subr.bf16.mxu0 0
          %839 = vmatpush2.bf16.msra.mxu0 0
          %840 = vmatprep.subr.bf16.mxu0 0
          %841 = vmatpush2.bf16.msra.mxu0 0
          %842 = vmatprep.subr.bf16.mxu0 0
          %843 = vmatpush2.bf16.msra.mxu0 0
          %844 = vmatprep.subr.bf16.mxu0 0
          %845 = vmatpush2.bf16.msra.mxu0 0
          %846 = vmatprep.subr.bf16.mxu0 0
          %847 = vmatpush2.bf16.msra.mxu0 0
          %848 = vmatprep.mubr.bf16.mxu0 0
          %849 = vmatmul.mubr.bf16.gmra.mxu0 %v587
          %v850 = vpop.f32.mrf.mxu0
          %v851 = vadd.f32 %v738, %v850
          %v852 = vpop.f32.mrf.mxu0
          %v853 = vpop.f32.mrf.mxu0
          %v854 = vadd.f32 %v741, %v853
          %v855 = vpop.f32.mrf.mxu0
          %856 = vmatprep.mubr.bf16.mxu0 0
          %857 = vmatmul.mubr.bf16.gmra.mxu0 %v588
          %v858 = vpop.f32.mrf.mxu0
          %v859 = vadd.f32 %v746, %v858
          %v860 = vpop.f32.mrf.mxu0
          %v861 = vpop.f32.mrf.mxu0
          %v862 = vadd.f32 %v749, %v861
          %v863 = vpop.f32.mrf.mxu0
          %864 = vmatprep.mubr.bf16.mxu0 0
          %865 = vmatmul.mubr.bf16.gmra.mxu0 %v589
          %v866 = vpop.f32.mrf.mxu0
          %v867 = vadd.f32 %v754, %v866
          %v868 = vpop.f32.mrf.mxu0
          %v869 = vpop.f32.mrf.mxu0
          %v870 = vadd.f32 %v757, %v869
          %v871 = vpop.f32.mrf.mxu0
          %872 = vmatprep.mubr.bf16.mxu0 0
          %873 = vmatmul.mubr.bf16.gmra.mxu0 %v590
          %v874 = vpop.f32.mrf.mxu0
          %v875 = vadd.f32 %v762, %v874
          %v876 = vpop.f32.mrf.mxu0
          %v877 = vpop.f32.mrf.mxu0
          %v878 = vadd.f32 %v765, %v877
          %v879 = vpop.f32.mrf.mxu0
          %880 = vdwg.mxu0
          %v881 = vld [vmem:[%s5] sm:$0x1]
          %v883 = vlaneseq
          %v884 = vshrl.u32 %v883, 7
          %v885 = vsub.s32 0, %v884
          %v886 = vrot.slane %v881, %v885
          %v888 = vadd.f32 %v851, %v886
          %v889 = vadd.f32 %v854, %v886
          %v890 = vadd.f32 %v859, %v886
          %v891 = vadd.f32 %v862, %v886
          %v892 = vadd.f32 %v867, %v886
          %v893 = vadd.f32 %v870, %v886
          %v894 = vadd.f32 %v875, %v886
          %v895 = vadd.f32 %v878, %v886
          %v896 = vmax.f32 %v888, 0.0
          %v897 = vmax.f32 %v889, 0.0
          %v898 = vmax.f32 %v890, 0.0
          %v899 = vmax.f32 %v891, 0.0
          %v900 = vmax.f32 %v892, 0.0
          %v901 = vmax.f32 %v893, 0.0
          %v902 = vmax.f32 %v894, 0.0
          %v903 = vmax.f32 %v895, 0.0
          %v904 = vpack.c.bf16 %v897, %v896
          %v905 = vpack.c.bf16 %v899, %v898
          %v906 = vpack.c.bf16 %v901, %v900
          %v907 = vpack.c.bf16 %v903, %v902
          %v912 = vunpack.c.l.b16 %v904
          %v913 = vunpack.c.h.b16 %v904
          %v914 = vunpack.c.l.b16 %v905
          %v915 = vunpack.c.h.b16 %v905
          %v916 = vunpack.c.l.b16 %v906
          %v917 = vunpack.c.h.b16 %v906
          %v918 = vunpack.c.l.b16 %v907
          %v919 = vunpack.c.h.b16 %v907
          %v920 = vpack.c.b16 %v912, %v912
          %v921 = vpack.c.b16 %v913, %v913
          %v922 = vpack.c.b16 %v914, %v914
          %v923 = vpack.c.b16 %v915, %v915
          %v924 = vpack.c.b16 %v916, %v916
          %v925 = vpack.c.b16 %v917, %v917
          %v926 = vpack.c.b16 %v918, %v918
          %v927 = vpack.c.b16 %v919, %v919
          %936 = vst [vmem:[%s373] sm:$0xf] %v920
          %937 = vst [vmem:[%s373 + $0x4] sm:$0xf] %v921
          %938 = vst [vmem:[%s373 + $0x8] sm:$0xf] %v922
          %939 = vst [vmem:[%s373 + $0xc] sm:$0xf] %v923
          %940 = vst [vmem:[%s373 + $0x10] sm:$0xf] %v924
          %941 = vst [vmem:[%s373 + $0x14] sm:$0xf] %v925
          %942 = vst [vmem:[%s373 + $0x18] sm:$0xf] %v926
          %943 = vst [vmem:[%s373 + $0x1c] sm:$0xf] %v927
        $region72: #{tpu_custom_call.1} parent=43 // pred_fallthru
          _
        %s944 = sand.u32 %s188, 1
        %s945 = scalar_lea.sflag [#allocation5], %s944
        %s946 = sand.u32 %s188, 1
        %s947 = smul.addr %s946, 32
        %s948 = scalar_lea.vmem [#allocation12], %s947
        // Predicated region
        $region73: #{tpu_custom_call.1} parent=43 // pred_check
          %p949 = pneg %p198
        $region74: #{tpu_custom_call.1} parent=43 // pred_check_branch
          %951 = sbr.rel (%p949) target = $region76
        $region75: #{tpu_custom_call.1} parent=43 // pred_region
          %s952 = smul.u32 8, %s29
          %s954 = ssub.s32 512, 512
          %955 = vsyncadd %s945, %s954
          %s956 = smul.addr %s952, 64
          %s957 = scalar_lea.hbm %s6, %s956
          %s958 = sshll.u32 %s948, 4
          %s959 = int_to_ptr.vmem [resolvable:$true] %s958
          %964 = dma.vmem_to_hbm [thread:$0]  %s959, 512, %s957, %s945, 64, 64, 4
        $region76: #{tpu_custom_call.1} parent=43 // pred_fallthru
          _
      $region44: #{tpu_custom_call.1} parent=5 // pred_fallthru
        _
      %p965 = scmp.le.s32.totalorder 2, %s20
      // Predicated region
      $region77: #{tpu_custom_call.1} parent=5 // pred_check
        %p966 = pneg %p965
      $region78: #{tpu_custom_call.1} parent=5 // pred_check_branch
        %968 = sbr.rel (%p966) target = $region80
      $region79: #{tpu_custom_call.1} parent=5 // pred_region
        %s969 = ssub.s32 %s20, 2
        // Predicated region
        $region81: #{tpu_custom_call.1} parent=79 // pred_check
          %p970 = pneg %p204
        $region82: #{tpu_custom_call.1} parent=79 // pred_check_branch
          %972 = sbr.rel (%p970) target = $region84
        $region83: #{tpu_custom_call.1} parent=79 // pred_region
          %s973 = sand.u32 %s189, 1
          %s974 = scalar_lea.sflag [#allocation5], %s973
          %s975 = sand.u32 %s189, 1
          %s976 = smul.addr %s975, 32
          %s977 = scalar_lea.vmem [#allocation12], %s976
          %978 = dma.done %s974, 512
        $region84: #{tpu_custom_call.1} parent=79 // pred_fallthru
          _
      $region80: #{tpu_custom_call.1} parent=5 // pred_fallthru
        _
    $region6: #{tpu_custom_call.1} parent=1 // loop_footer
      %s24 = sadd.s32 1, %s20
    $region7: #{tpu_custom_call.1} parent=1 // loop_footer_branch
      %19 = sbr.rel target = $region3
    $region8: #{tpu_custom_call.1} parent=1 // loop_exit
      _
    %979 = vsyncpa [#allocation4], 1
    %s980 = scalar_lea.sflag [#allocation4], 1
    %981 = vsyncpa %s980, 1
    %982 = vsyncpa [#allocation7], 1
    %983 = vsyncpa [#allocation11], 1
    %984 = vsyncpa [#allocation5], 1
    %s985 = scalar_lea.sflag [#allocation5], 1
    %986 = vsyncpa %s985, 1

</llo_original>
